<compile_context>
chip_gen: v6e
topology: v6e:2x2x1
jax: 0.10.0
libtpu: 0.0.40
codegen_flags: <defaults>
</compile_context>

<pallas_src>
import functools
import math

import jax
import jax.numpy as jnp
import numpy as np
from jax.experimental import pallas as pl
from jax.experimental.pallas import tpu as pltpu


# ---------------------------------------------------------------------------
# Chip detection / VMEM budgets
# ---------------------------------------------------------------------------

def _detect_v7x():
    try:
        kind = jax.devices()[0].device_kind.lower().replace(" ", "")
        return ("v7" in kind) or ("tpu7" in kind)
    except Exception:
        return False


_IS_V7X = _detect_v7x()


def _vmem_capacity_bytes():
    try:
        return int(pltpu.get_tpu_info().vmem_capacity_bytes)
    except Exception:
        return 64 * 1024 * 1024 if _IS_V7X else 128 * 1024 * 1024


_VMEM_CAP = _vmem_capacity_bytes()

if _VMEM_CAP >= 128 * 1024 * 1024:          # v5e / v6e: 128 MiB physical VMEM
    _BLOCK_BUDGET = 24 * 1024 * 1024        # double-buffered in+out blocks
    _VMEM_LIMIT = 64 * 1024 * 1024
    _MAX_ROW_TILE = 2048
else:                                        # v7x: 64 MiB physical, tighter scoped
    _BLOCK_BUDGET = 10 * 1024 * 1024
    _VMEM_LIMIT = 28 * 1024 * 1024
    _MAX_ROW_TILE = 1024


def _pick_row_tile(rows, features, itemsize):
    """Largest row tile whose pipelined blocks + f32 temps fit the VMEM budget."""
    # 2 row-shaped inputs + 2 row-shaped outputs, each double-buffered (x2),
    # plus ~3 f32 full-tile working values (sum, centered, normalized) that the
    # compiler materializes as scratch (previously unbudgeted -> v7x pressure).
    bytes_per_row = features * (2 * 4 * itemsize + 3 * 4)
    tile = _BLOCK_BUDGET // max(bytes_per_row, 1)
    tile = max(8, min(tile, _MAX_ROW_TILE))
    if rows <= tile:
        # Everything fits in one block.  On v7x only, split into two 'parallel'
        # grid steps so both TensorCores get work; on v5e/v6e a split is pure
        # per-step overhead.
        if _IS_V7X and rows >= 16:
            half = ((rows + 1) // 2 + 7) // 8 * 8
            if half < rows:
                return half
        return rows          # full-dim row block: legal even if rows % 8 != 0
    return (tile // 8) * 8


# ---------------------------------------------------------------------------
# Fused residual-add + LayerNorm Pallas kernel
#   res  = x + y
#   mean = res.mean(-1);  std = res.std(-1, unbiased)          (torch semantics)
#   out  = gamma * (res - mean) / (std + eps) + beta
# ---------------------------------------------------------------------------

def _add_layer_norm_kernel(x_ref, y_ref, gamma_ref, beta_ref, res_ref, o_ref,
                           *, eps, inv_n, inv_nm1):
    # Blocks: x/y/res/o: (TILE_R, F) with F the full feature dim; gamma/beta (1, F).
    s = x_ref[...].astype(jnp.float32) + y_ref[...].astype(jnp.float32)
    res_ref[...] = s.astype(res_ref.dtype)
    # Two-pass centered variance inside the VMEM-resident tile (no cancellation).
    mean = jnp.sum(s, axis=-1, keepdims=True) * inv_n
    centered = s - mean
    var = jnp.sum(centered * centered, axis=-1, keepdims=True) * inv_nm1
    std = jnp.sqrt(var)
    # Reciprocal on the (TILE_R, 1) reduced vector instead of a full-tile divide.
    inv = pl.reciprocal(std + eps, approx=False)
    gamma = gamma_ref[...].astype(jnp.float32)
    beta = beta_ref[...].astype(jnp.float32)
    o_ref[...] = (centered * inv * gamma + beta).astype(o_ref.dtype)


def add_layer_norm_pallas(x, y, gamma, beta, eps=1e-6):
    """Returns (x + y, LayerNorm(x + y)) with torch-style unbiased std."""
    assert x.shape == y.shape
    orig_shape = x.shape
    features = orig_shape[-1]
    x2d = x.reshape(-1, features)
    y2d = y.reshape(-1, features)
    rows = x2d.shape[0]

    tile_r = _pick_row_tile(rows, features, jnp.dtype(x.dtype).itemsize)
    grid = (pl.cdiv(rows, tile_r),)          # ragged last block masked by Pallas

    gamma2d = gamma.reshape(1, features)
    beta2d = beta.reshape(1, features)

    kernel = functools.partial(
        _add_layer_norm_kernel,
        eps=float(eps),
        inv_n=1.0 / features,
        # NOTE: features == 1 would be NaN in torch (unbiased std); we clamp.
        inv_nm1=1.0 / max(features - 1, 1),
    )

    res, out = pl.pallas_call(
        kernel,
        out_shape=(jax.ShapeDtypeStruct((rows, features), x.dtype),
                   jax.ShapeDtypeStruct((rows, features), x.dtype)),
        grid_spec=pltpu.PrefetchScalarGridSpec(
            num_scalar_prefetch=0,
            grid=grid,
            in_specs=[
                pl.BlockSpec((tile_r, features), lambda i: (i, 0)),
                pl.BlockSpec((tile_r, features), lambda i: (i, 0)),
                pl.BlockSpec((1, features), lambda i: (0, 0)),
                pl.BlockSpec((1, features), lambda i: (0, 0)),
            ],
            out_specs=[
                pl.BlockSpec((tile_r, features), lambda i: (i, 0)),
                pl.BlockSpec((tile_r, features), lambda i: (i, 0)),
            ],
        ),
        compiler_params=pltpu.CompilerParams(
            dimension_semantics=("parallel",),
            vmem_limit_bytes=_VMEM_LIMIT,
        ),
    )(x2d, y2d, gamma2d, beta2d)

    return res.reshape(orig_shape), out.reshape(orig_shape)


def add_layer_norm_reference(x, y, gamma, beta, eps=1e-6):
    """Pure-jnp torch-semantics fused add + LayerNorm for checking."""
    s = x + y
    mean = jnp.mean(s, axis=-1, keepdims=True)
    var = jnp.sum((s - mean) ** 2, axis=-1, keepdims=True) / (s.shape[-1] - 1)
    std = jnp.sqrt(var)
    return s, gamma * (s - mean) / (std + eps) + beta


# ---------------------------------------------------------------------------
# Encoder forward (projection, timing signal, MHA, conv-FFN) in plain JAX,
# using the fused Pallas add+LayerNorm for every normalization.
# ---------------------------------------------------------------------------

def _mm(a, b):
    """MXU-friendly matmul: bf16 operands, f32 accumulation."""
    return jnp.dot(a.astype(jnp.bfloat16), b.astype(jnp.bfloat16),
                   preferred_element_type=jnp.float32)


def _gen_timing_signal(length, channels, min_timescale=1.0, max_timescale=1.0e4):
    position = np.arange(length, dtype=np.float64)
    num_timescales = channels // 2
    log_inc = math.log(float(max_timescale) / float(min_timescale)) / (float(num_timescales) - 1)
    inv_timescales = min_timescale * np.exp(np.arange(num_timescales, dtype=np.float64) * -log_inc)
    scaled_time = position[:, None] * inv_timescales[None, :]
    signal = np.concatenate([np.sin(scaled_time), np.cos(scaled_time)], axis=1)
    signal = np.pad(signal, [[0, 0], [0, channels % 2]], mode="constant")
    return jnp.asarray(signal.reshape(1, length, channels), dtype=jnp.float32)


def _init_encoder_params(key, embedding_size, hidden_size, num_layers, num_heads,
                         total_key_depth, total_value_depth, filter_size):
    def dense(k, fan_in, fan_out):
        return jax.random.normal(k, (fan_in, fan_out), jnp.float32) * (1.0 / math.sqrt(fan_in))

    keys = jax.random.split(key, 1 + num_layers)
    params = {"embedding_proj": dense(keys[0], embedding_size, hidden_size), "layers": []}
    for l in range(num_layers):
        lk = jax.random.split(keys[1 + l], 6)
        params["layers"].append({
            "wq": dense(lk[0], hidden_size, total_key_depth),
            "wk": dense(lk[1], hidden_size, total_key_depth),
            "wv": dense(lk[2], hidden_size, total_value_depth),
            "wo": dense(lk[3], total_value_depth, hidden_size),
            "conv1_w": jax.random.normal(lk[4], (3, hidden_size, filter_size), jnp.float32)
                       * (1.0 / math.sqrt(3 * hidden_size)),
            "conv1_b": jnp.zeros((filter_size,), jnp.float32),
            "conv2_w": jax.random.normal(lk[5], (3, filter_size, hidden_size), jnp.float32)
                       * (1.0 / math.sqrt(3 * filter_size)),
            "conv2_b": jnp.zeros((hidden_size,), jnp.float32),
            "ln_mha_gamma": jnp.ones((hidden_size,), jnp.float32),
            "ln_mha_beta": jnp.zeros((hidden_size,), jnp.float32),
            "ln_ffn_gamma": jnp.ones((hidden_size,), jnp.float32),
            "ln_ffn_beta": jnp.zeros((hidden_size,), jnp.float32),
        })
    params["ln_out_gamma"] = jnp.ones((hidden_size,), jnp.float32)
    params["ln_out_beta"] = jnp.zeros((hidden_size,), jnp.float32)
    return params


def _multi_head_attention(x, p, num_heads):
    B, L, _ = x.shape
    q = _mm(x, p["wq"])
    k = _mm(x, p["wk"])
    v = _mm(x, p["wv"])

    def split_heads(t):
        return t.reshape(B, L, num_heads, -1).transpose(0, 2, 1, 3)

    head_dim = p["wq"].shape[1] // num_heads
    q = split_heads(q) * (head_dim ** -0.5)
    k = split_heads(k)
    v = split_heads(v)
    # TODO(synk): replace with a fused flash-attention Pallas kernel for long seqs.
    logits = jnp.einsum("bhqd,bhkd->bhqk",
                        q.astype(jnp.bfloat16), k.astype(jnp.bfloat16),
                        preferred_element_type=jnp.float32)   # use_mask=False
    weights = jax.nn.softmax(logits, axis=-1)
    ctx = jnp.einsum("bhqk,bhkd->bhqd",
                     weights.astype(jnp.bfloat16), v.astype(jnp.bfloat16),
                     preferred_element_type=jnp.float32)
    ctx = ctx.transpose(0, 2, 1, 3).reshape(B, L, -1)
    return _mm(ctx, p["wo"])


def _conv1d_both(x, w, b):
    # x: (B, L, Cin), w: (K, Cin, Cout), b: (Cout,); pad_type='both', stride 1.
    # im2col: one deep (K*Cin) contraction keeps the MXU full instead of K
    # shallow per-tap matmuls + accumulate passes.
    K, cin, cout = w.shape
    B, L, _ = x.shape
    xp = jnp.pad(x, ((0, 0), (K // 2, (K - 1) // 2), (0, 0)))
    cols = jnp.concatenate([xp[:, k:k + L, :] for k in range(K)], axis=-1)
    out = _mm(cols.reshape(B * L, K * cin), w.reshape(K * cin, cout))
    return out.reshape(B, L, cout) + b


def _positionwise_ff(x, p):
    # layer_config='cc', padding='both'; the reference applies ReLU after EVERY
    # layer (the `if i < len(self.layers)` condition is always true).
    y = _conv1d_both(x, p["conv1_w"], p["conv1_b"])
    y = jax.nn.relu(y)
    y = _conv1d_both(y, p["conv2_w"], p["conv2_b"])
    y = jax.nn.relu(y)
    return y


def encoder_forward(params, inputs, timing_signal, num_heads, add_ln_fn, eps=1e-6):
    """Matches torchnlp Encoder.forward with all dropouts at p=0 (identity).

    Every `residual + delta` is fused into the following LayerNorm via
    add_ln_fn(x, delta) -> (x + delta, LN(x + delta)).
    """
    B, L, _ = inputs.shape
    x = _mm(inputs, params["embedding_proj"])                 # input_dropout(0) -> id
    pending = jnp.broadcast_to(timing_signal[:, :L, :], (B, L, x.shape[-1])).astype(x.dtype)
    for p in params["layers"]:
        x, x_norm = add_ln_fn(x, pending, p["ln_mha_gamma"], p["ln_mha_beta"], eps)
        y = _multi_head_attention(x_norm, p, num_heads)
        x, x_norm = add_ln_fn(x, y, p["ln_ffn_gamma"], p["ln_ffn_beta"], eps)
        pending = _positionwise_ff(x_norm, p)
    _, out = add_ln_fn(x, pending, params["ln_out_gamma"], params["ln_out_beta"], eps)
    return out


if __name__ == "__main__":
    # Small config: batch=2, seq=8, embedding=hidden=32, 2 layers, 4 heads.
    batch, seq = 2, 8
    embedding_size = 32
    hidden_size = 32
    num_layers = 2
    num_heads = 4
    total_key_depth = 32
    total_value_depth = 32
    filter_size = 64
    max_length = 100

    root = jax.random.PRNGKey(0)
    k_in, k_res, k_g, k_b, k_par = jax.random.split(root, 5)
    inputs = jax.random.normal(k_in, (batch, seq, embedding_size), jnp.float32)
    params = _init_encoder_params(
        k_par, embedding_size, hidden_size, num_layers, num_heads,
        total_key_depth, total_value_depth, filter_size)
    timing = _gen_timing_signal(max_length, hidden_size)

    # 1) Direct check of the fused add+LayerNorm Pallas kernel (f32, tight tol).
    xa = jax.random.normal(k_in, (batch, seq, hidden_size), jnp.float32)
    xb = jax.random.normal(k_res, (batch, seq, hidden_size), jnp.float32)
    gamma = 1.0 + 0.1 * jax.random.normal(k_g, (hidden_size,), jnp.float32)
    beta = 0.1 * jax.random.normal(k_b, (hidden_size,), jnp.float32)
    res_p, out_p = add_layer_norm_pallas(xa, xb, gamma, beta, 1e-6)
    jax.block_until_ready(out_p)
    res_r, out_r = add_layer_norm_reference(xa, xb, gamma, beta, 1e-6)
    assert jnp.allclose(res_p, res_r, atol=1e-6, rtol=1e-6), "residual mismatch"
    assert jnp.allclose(out_p, out_r, atol=1e-5, rtol=1e-5), "LayerNorm kernel mismatch"

    # 2) Full Encoder forward: Pallas fused add+LN vs pure-jnp reference LN,
    #    both using the same bf16-operand / f32-accumulation matmul path.
    enc_pallas = jax.jit(functools.partial(
        encoder_forward, num_heads=num_heads, add_ln_fn=add_layer_norm_pallas))
    enc_ref = jax.jit(functools.partial(
        encoder_forward, num_heads=num_heads, add_ln_fn=add_layer_norm_reference))
    out = jax.block_until_ready(enc_pallas(params, inputs, timing))
    ref = jax.block_until_ready(enc_ref(params, inputs, timing))
    assert out.shape == (batch, seq, hidden_size)
    # bf16 operand rounding can amplify few-ulp LN differences, so the
    # end-to-end tolerance is looser than the direct kernel check above.
    assert jnp.allclose(out, ref, atol=5e-3, rtol=5e-3), "Encoder output mismatch"

    print("KERNEL_OK")
</pallas_src>

<mosaic_0001>
module attributes {stable_mosaic.version = 11 : i64} {
  func.func @_add_layer_norm_kernel(%arg0: i32, %arg1: memref<16x32xf32, #tpu.memory_space<vmem>>, %arg2: memref<16x32xf32, #tpu.memory_space<vmem>>, %arg3: memref<1x32xf32, #tpu.memory_space<vmem>>, %arg4: memref<1x32xf32, #tpu.memory_space<vmem>>, %arg5: memref<16x32xf32, #tpu.memory_space<vmem>>, %arg6: memref<16x32xf32, #tpu.memory_space<vmem>>) attributes {dimension_semantics = [#tpu.dimension_semantics<parallel>], iteration_bounds = array<i64: 1>, scalar_prefetch = 0 : i64, scratch_operands = 0 : i64, tpu.core_type = #tpu.core_type<tc>, window_params = [{transform_indices = @transform_0, window_bounds = array<i64: 16, 32>}, {transform_indices = @transform_1, window_bounds = array<i64: 16, 32>}, {pipeline_mode = #tpu.pipeline_mode<synchronous>, transform_indices = @transform_2, window_bounds = array<i64: 1, 32>}, {pipeline_mode = #tpu.pipeline_mode<synchronous>, transform_indices = @transform_3, window_bounds = array<i64: 1, 32>}, {transform_indices = @transform_4, window_bounds = array<i64: 16, 32>}, {transform_indices = @transform_5, window_bounds = array<i64: 16, 32>}]} {
    %c0 = arith.constant 0 : index
    %c0_0 = arith.constant 0 : index
    %0 = vector.load %arg1[%c0, %c0_0] : memref<16x32xf32, #tpu.memory_space<vmem>>, vector<16x32xf32>
    %c0_1 = arith.constant 0 : index
    %c0_2 = arith.constant 0 : index
    %1 = vector.load %arg2[%c0_1, %c0_2] : memref<16x32xf32, #tpu.memory_space<vmem>>, vector<16x32xf32>
    %2 = arith.addf %0, %1 : vector<16x32xf32>
    %c0_3 = arith.constant 0 : index
    %c0_4 = arith.constant 0 : index
    %3 = vector.load %arg5[%c0_3, %c0_4] : memref<16x32xf32, #tpu.memory_space<vmem>>, vector<16x32xf32>
    tpu.vector_store %arg5[%c0_3, %c0_4], %2 {strides = array<i32>} : memref<16x32xf32, #tpu.memory_space<vmem>>, vector<16x32xf32>,
    %cst = arith.constant dense<0.000000e+00> : vector<16xf32>
    %4 = vector.multi_reduction <add>, %2, %cst [1] : vector<16x32xf32> to vector<16xf32>
    %5 = vector.shape_cast %4 : vector<16xf32> to vector<16x1xf32>
    %cst_5 = arith.constant 3.125000e-02 : f32
    %6 = vector.broadcast %cst_5 : f32 to vector<16x1xf32>
    %7 = arith.mulf %5, %6 : vector<16x1xf32>
    %8 = vector.broadcast %7 : vector<16x1xf32> to vector<16x32xf32>
    %9 = arith.subf %2, %8 : vector<16x32xf32>
    %10 = arith.mulf %9, %9 : vector<16x32xf32>
    %cst_6 = arith.constant dense<0.000000e+00> : vector<16xf32>
    %11 = vector.multi_reduction <add>, %10, %cst_6 [1] : vector<16x32xf32> to vector<16xf32>
    %12 = vector.shape_cast %11 : vector<16xf32> to vector<16x1xf32>
    %cst_7 = arith.constant 0.0322580636 : f32
    %13 = vector.broadcast %cst_7 : f32 to vector<16x1xf32>
    %14 = arith.mulf %12, %13 : vector<16x1xf32>
    %15 = math.sqrt %14 : vector<16x1xf32>
    %cst_8 = arith.constant 9.99999997E-7 : f32
    %16 = vector.broadcast %cst_8 : f32 to vector<16x1xf32>
    %17 = arith.addf %15, %16 : vector<16x1xf32>
    %18 = tpu.reciprocal %17 : vector<16x1xf32> -> vector<16x1xf32>
    %c0_9 = arith.constant 0 : index
    %c0_10 = arith.constant 0 : index
    %19 = vector.load %arg3[%c0_9, %c0_10] : memref<1x32xf32, #tpu.memory_space<vmem>>, vector<1x32xf32>
    %c0_11 = arith.constant 0 : index
    %c0_12 = arith.constant 0 : index
    %20 = vector.load %arg4[%c0_11, %c0_12] : memref<1x32xf32, #tpu.memory_space<vmem>>, vector<1x32xf32>
    %21 = vector.broadcast %18 : vector<16x1xf32> to vector<16x32xf32>
    %22 = arith.mulf %9, %21 : vector<16x32xf32>
    %23 = vector.broadcast %19 : vector<1x32xf32> to vector<16x32xf32>
    %24 = arith.mulf %22, %23 : vector<16x32xf32>
    %25 = vector.broadcast %20 : vector<1x32xf32> to vector<16x32xf32>
    %26 = arith.addf %24, %25 : vector<16x32xf32>
    %c0_13 = arith.constant 0 : index
    %c0_14 = arith.constant 0 : index
    %27 = vector.load %arg6[%c0_13, %c0_14] : memref<16x32xf32, #tpu.memory_space<vmem>>, vector<16x32xf32>
    tpu.vector_store %arg6[%c0_13, %c0_14], %26 {strides = array<i32>} : memref<16x32xf32, #tpu.memory_space<vmem>>, vector<16x32xf32>,
    return
  }
  func.func @transform_0(%arg0: i32) -> (i32, i32) {
    %c0_i32 = arith.constant 0 : i32
    %c0_i32_0 = arith.constant 0 : i32
    return %arg0, %c0_i32 : i32, i32
  }
  func.func @transform_1(%arg0: i32) -> (i32, i32) {
    %c0_i32 = arith.constant 0 : i32
    %c0_i32_0 = arith.constant 0 : i32
    return %arg0, %c0_i32 : i32, i32
  }
  func.func @transform_2(%arg0: i32) -> (i32, i32) {
    %c0_i32 = arith.constant 0 : i32
    %c0_i32_0 = arith.constant 0 : i32
    %c0_i32_1 = arith.constant 0 : i32
    return %c0_i32, %c0_i32_0 : i32, i32
  }
  func.func @transform_3(%arg0: i32) -> (i32, i32) {
    %c0_i32 = arith.constant 0 : i32
    %c0_i32_0 = arith.constant 0 : i32
    %c0_i32_1 = arith.constant 0 : i32
    return %c0_i32, %c0_i32_0 : i32, i32
  }
  func.func @transform_4(%arg0: i32) -> (i32, i32) {
    %c0_i32 = arith.constant 0 : i32
    %c0_i32_0 = arith.constant 0 : i32
    return %arg0, %c0_i32 : i32, i32
  }
  func.func @transform_5(%arg0: i32) -> (i32, i32) {
    %c0_i32 = arith.constant 0 : i32
    %c0_i32_0 = arith.constant 0 : i32
    return %arg0, %c0_i32 : i32, i32
  }
}

</mosaic_0001>

<llo_original>
// kernel: tpu_custom_call.1
$region0: #{tpu_custom_call.1}
  #allocation0 [shape = 'u32[]', space=smem, size = 0x4, offset = 0x4, fixed_abs, tag = 'smem constant byte address 0x4 - core index']
  #allocation1 [shape = 'u32[144,128]{1,0:T(1,128)}', space=vmem, size = 0x12000, scoped, tag = 'internal scratch']
  %s0 = inlined_call_operand.hbm [shape: f32[16,32], index: 0, kind: input, shape index: {}]
  %s1 = inlined_call_operand.hbm [shape: f32[16,32], index: 1, kind: input, shape index: {}]
  %s2 = inlined_call_operand.vmem [shape: f32[1,32], index: 2, kind: input, shape index: {}]
  %s3 = inlined_call_operand.vmem [shape: f32[1,32], index: 3, kind: input, shape index: {}]
  %s4 = inlined_call_operand.hbm [shape: f32[16,32], index: 4, kind: output, shape index: {0}]
  %s5 = inlined_call_operand.hbm [shape: f32[16,32], index: 5, kind: output, shape index: {1}]
  %6 = xla_tuple %s4, %s5
  %s7 = sld [smem:[#allocation0]]
  $region42: #{tpu_custom_call.1} parent=0
    _
  %s9 = ssub.s32 1, %s7
  %s10 = scalar_select 0, %s9, %s7
  $region1: #{tpu_custom_call.1} parent=0
    #allocation2 [shape = 'u8[8192]{0}', space=vmem, size = 0x2000, scoped, tag = 'input window, operand 0, single buffered']
    #allocation3 [shape = 's32[1]{0}', space=sflag, size = 0x4, scoped, tag = 'scoped memory for tpu_custom_call.1']
    #allocation4 [shape = 's32[1]{0}', space=sflag, size = 0x4, scoped, tag = 'scoped memory for tpu_custom_call.1']
    #allocation5 [shape = 'u8[8192]{0}', space=vmem, size = 0x2000, scoped, tag = 'input window, operand 1, single buffered']
    #allocation6 [shape = 's32[1]{0}', space=sflag, size = 0x4, scoped, tag = 'scoped memory for tpu_custom_call.1']
    #allocation7 [shape = 'u8[8192]{0}', space=vmem, size = 0x2000, scoped, tag = 'output window, operand 0, single buffered']
    #allocation8 [shape = 'u8[8192]{0}', space=vmem, size = 0x2000, scoped, tag = 'output window, operand 1, single buffered']
    #allocation9 [shape = 's32[1]{0}', space=sflag, size = 0x4, scoped, tag = 'scoped memory for tpu_custom_call.1']
    %11 = vsyncpa [#allocation3], 0
    %12 = vsyncpa [#allocation6], 0
    %13 = vsyncpa [#allocation4], 0
    %14 = vsyncpa [#allocation9], 0
    // Predicated region
    $region2: #{tpu_custom_call.1} parent=1 // pred_check
      _
    $region3: #{tpu_custom_call.1} parent=1 // pred_check_branch
      %16 = sbr.rel (0) target = $region5
    $region4: #{tpu_custom_call.1} parent=1 // pred_region
      %s18 = ssub.s32 256, 256
      %19 = vsyncadd [#allocation3], %s18
      %s20 = sshll.u32 [#allocation2], 4
      %s21 = int_to_ptr.vmem [resolvable:$true] %s20
      %26 = dma.hbm_to_vmem [thread:$0]  %s0, 256, %s21, [#allocation3], 128, 128, 8
    $region5: #{tpu_custom_call.1} parent=1 // pred_fallthru
      _
    // Predicated region
    $region6: #{tpu_custom_call.1} parent=1 // pred_check
      _
    $region7: #{tpu_custom_call.1} parent=1 // pred_check_branch
      %28 = sbr.rel (0) target = $region9
    $region8: #{tpu_custom_call.1} parent=1 // pred_region
      %s30 = ssub.s32 256, 256
      %31 = vsyncadd [#allocation6], %s30
      %s32 = sshll.u32 [#allocation5], 4
      %s33 = int_to_ptr.vmem [resolvable:$true] %s32
      %38 = dma.hbm_to_vmem [thread:$0]  %s1, 256, %s33, [#allocation6], 128, 128, 8
    $region9: #{tpu_custom_call.1} parent=1 // pred_fallthru
      _
    // Predicated region
    $region10: #{tpu_custom_call.1} parent=1 // pred_check
      _
    $region11: #{tpu_custom_call.1} parent=1 // pred_check_branch
      %40 = sbr.rel (0) target = $region13
    $region12: #{tpu_custom_call.1} parent=1 // pred_region
      _
    $region13: #{tpu_custom_call.1} parent=1 // pred_fallthru
      _
    // Predicated region
    $region14: #{tpu_custom_call.1} parent=1 // pred_check
      _
    $region15: #{tpu_custom_call.1} parent=1 // pred_check_branch
      %42 = sbr.rel (0) target = $region17
    $region16: #{tpu_custom_call.1} parent=1 // pred_region
      _
    $region17: #{tpu_custom_call.1} parent=1 // pred_fallthru
      _
    // Predicated region
    $region18: #{tpu_custom_call.1} parent=1 // pred_check
      _
    $region19: #{tpu_custom_call.1} parent=1 // pred_check_branch
      %44 = sbr.rel (0) target = $region21
    $region20: #{tpu_custom_call.1} parent=1 // pred_region
      %45 = dma.done [#allocation3], 256
    $region21: #{tpu_custom_call.1} parent=1 // pred_fallthru
      _
    // Predicated region
    $region22: #{tpu_custom_call.1} parent=1 // pred_check
      _
    $region23: #{tpu_custom_call.1} parent=1 // pred_check_branch
      %47 = sbr.rel (0) target = $region25
    $region24: #{tpu_custom_call.1} parent=1 // pred_region
      %48 = dma.done [#allocation6], 256
    $region25: #{tpu_custom_call.1} parent=1 // pred_fallthru
      _
    %v49 = vld [vmem:[#allocation2] sm:$0xff]
    %v50 = vld [vmem:[#allocation2 + $0x8] sm:$0xff]
    %v51 = vld [vmem:[#allocation5] sm:$0xff]
    %v52 = vld [vmem:[#allocation5 + $0x8] sm:$0xff]
    %v53 = vadd.f32 %v49, %v51
    %v54 = vadd.f32 %v50, %v52
    %vm55 = vcmask 261120
    %56 = vst.msk [vmem:[#allocation7] sm:$0xff] %vm55, %v53
    %57 = vst.msk [vmem:[#allocation7 + $0x8] sm:$0xff] %vm55, %v54
    %v58 = vsel %vm55, %v53, 0.0
    %59 = vadd.xlane.f32.xlu0 %v58
    %v60 = vpop.xlane.xlu0 %59
    %v61 = vsel %vm55, %v54, 0.0
    %62 = vadd.xlane.f32.xlu0 %v61
    %v63 = vpop.xlane.xlu0 %62
    %v64 = vmul.f32 %v60, 0.03125
    %v65 = vmul.f32 %v63, 0.03125
    %v66 = vsub.f32 %v53, %v64
    %v67 = vsub.f32 %v54, %v65
    %v68 = vmul.f32 %v66, %v66
    %v69 = vmul.f32 %v67, %v67
    %v70 = vsel %vm55, %v68, 0.0
    %71 = vadd.xlane.f32.xlu0 %v70
    %v72 = vpop.xlane.xlu0 %71
    %v73 = vsel %vm55, %v69, 0.0
    %74 = vadd.xlane.f32.xlu0 %v73
    %v75 = vpop.xlane.xlu0 %74
    %v76 = vmul.f32 %v72, 0.032258064
    %v77 = vmul.f32 %v75, 0.032258064
    %v78 = vrsqrt.pop %v76
    %v79 = vmul.f32 %v76, %v78
    %vm80 = vcmp.eq.f32.partialorder %v76, inf
    %v81 = vsel %vm80, %v76, %v79
    %vm82 = vcmp.eq.f32.partialorder %v76, 0.0
    %v83 = vand.u32 %v76, 2147483648
    %v84 = vsel %vm82, %v83, %v81
    %v85 = vrsqrt.pop %v77
    %v86 = vmul.f32 %v77, %v85
    %vm87 = vcmp.eq.f32.partialorder %v77, inf
    %v88 = vsel %vm87, %v77, %v86
    %vm89 = vcmp.eq.f32.partialorder %v77, 0.0
    %v90 = vand.u32 %v77, 2147483648
    %v91 = vsel %vm89, %v90, %v88
    %v92 = vadd.f32 %v84, 1e-06
    %v93 = vadd.f32 %v91, 1e-06
    %v94 = vrcp.pop %v92
    %v95 = vrcp.pop %v93
    %v96 = vld [vmem:[%s2] sm:$0x1]
    %v97 = vld [vmem:[%s3] sm:$0x1]
    %v98 = vmul.f32 %v66, %v94
    %v99 = vmul.f32 %v67, %v95
    %v101 = vlaneseq
    %v102 = vshrl.u32 %v101, 7
    %v103 = vsub.s32 0, %v102
    %v104 = vrot.slane %v96, %v103
    %v106 = vmul.f32 %v98, %v104
    %v107 = vmul.f32 %v99, %v104
    %v109 = vlaneseq
    %v110 = vshrl.u32 %v109, 7
    %v111 = vsub.s32 0, %v110
    %v112 = vrot.slane %v97, %v111
    %v114 = vadd.f32 %v106, %v112
    %v115 = vadd.f32 %v107, %v112
    %116 = vst.msk [vmem:[#allocation8] sm:$0xff] %vm55, %v114
    %117 = vst.msk [vmem:[#allocation8 + $0x8] sm:$0xff] %vm55, %v115
    // Predicated region
    $region26: #{tpu_custom_call.1} parent=1 // pred_check
      _
    $region27: #{tpu_custom_call.1} parent=1 // pred_check_branch
      %119 = sbr.rel (0) target = $region29
    $region28: #{tpu_custom_call.1} parent=1 // pred_region
      %s121 = ssub.s32 256, 256
      %122 = vsyncadd [#allocation4], %s121
      %s123 = sshll.u32 [#allocation7], 4
      %s124 = int_to_ptr.vmem [resolvable:$true] %s123
      %129 = dma.vmem_to_hbm [thread:$0]  %s124, 256, %s4, [#allocation4], 128, 128, 8
    $region29: #{tpu_custom_call.1} parent=1 // pred_fallthru
      _
    // Predicated region
    $region30: #{tpu_custom_call.1} parent=1 // pred_check
      _
    $region31: #{tpu_custom_call.1} parent=1 // pred_check_branch
      %131 = sbr.rel (0) target = $region33
    $region32: #{tpu_custom_call.1} parent=1 // pred_region
      %s133 = ssub.s32 256, 256
      %134 = vsyncadd [#allocation9], %s133
      %s135 = sshll.u32 [#allocation8], 4
      %s136 = int_to_ptr.vmem [resolvable:$true] %s135
      %141 = dma.vmem_to_hbm [thread:$0]  %s136, 256, %s5, [#allocation9], 128, 128, 8
    $region33: #{tpu_custom_call.1} parent=1 // pred_fallthru
      _
    // Predicated region
    $region34: #{tpu_custom_call.1} parent=1 // pred_check
      _
    $region35: #{tpu_custom_call.1} parent=1 // pred_check_branch
      %143 = sbr.rel (0) target = $region37
    $region36: #{tpu_custom_call.1} parent=1 // pred_region
      %144 = dma.done [#allocation4], 256
    $region37: #{tpu_custom_call.1} parent=1 // pred_fallthru
      _
    // Predicated region
    $region38: #{tpu_custom_call.1} parent=1 // pred_check
      _
    $region39: #{tpu_custom_call.1} parent=1 // pred_check_branch
      %146 = sbr.rel (0) target = $region41
    $region40: #{tpu_custom_call.1} parent=1 // pred_region
      %147 = dma.done [#allocation9], 256
    $region41: #{tpu_custom_call.1} parent=1 // pred_fallthru
      _
    %148 = vsyncpa [#allocation3], 1
    %149 = vsyncpa [#allocation6], 1
    %150 = vsyncpa [#allocation4], 1
    %151 = vsyncpa [#allocation9], 1

</llo_original>
